<compile_context>
chip_gen: v7x
topology: tpu7x:2x2x1
jax: 0.10.0
libtpu: 0.0.40
codegen_flags: <defaults>
</compile_context>

<pallas_src>
import jax
import jax.numpy as jnp
import numpy as np
from jax.experimental import pallas as pl
from jax.experimental.pallas import tpu as pltpu


def _value_guide_kernel(x_ref, t2_ref, sc_ref, o_ref):
    """One batch tile of the collapsed quadratic value model.

    x_ref  : VMEM (B_TILE, HD)   trajectory tile, flattened over (H, D),
                                 native dtype (f32 or bf16) -- cast here
    t2_ref : VMEM (1, HD) f32    2 * weight-averaged target (resident)
    sc_ref : SMEM (2,)    f32    [ -c/HD , -1/HD ]   (prefolded scalars)
    o_ref  : VMEM (B_TILE, 1) f32  value per trajectory in the tile
    """
    x = x_ref[...].astype(jnp.float32)                   # bf16-over-the-wire friendly
    # ||x_b||^2 - 2 x_b·t̄  in one lane-dense pass, single cross-lane reduce
    s = jnp.sum(x * (x - t2_ref[...]), axis=1, keepdims=True)   # (B_TILE, 1)
    o_ref[...] = s * sc_ref[1] + sc_ref[0]


def _pick_b_tile(Bp, HD, itemsize, requested=None, target_bytes=8 << 20):
    """Largest multiple-of-8 divisor of Bp under a per-buffer VMEM budget."""
    cap = max(8, min(Bp, (target_bytes // max(1, HD * itemsize)) // 8 * 8))
    if requested is not None:
        cap = min(cap, max(8, (int(requested) // 8) * 8))
    for t in range(cap, 7, -8):
        if Bp % t == 0:
            return t
    return 8


def value_guide_forward(x, cond, t, targets, weights, *, b_tile=None):
    """ValueGuide.forward: model(x, cond, t).squeeze(-1) -> shape (B,)."""
    # TODO(synk): a learned value network conditioning on `cond`/`t` would need
    # its parameters fed via extra BlockSpecs; this quadratic model ignores
    # them (API parity only).
    del cond, t
    B, H, D = x.shape
    G = targets.shape[0]
    HD = H * D

    # ---- tiny one-time reductions for the algebraic collapse (wrapper) ----
    w = weights.astype(jnp.float32)
    w_norm = w / jnp.sum(w)                                        # w̃_g
    tgt = targets.astype(jnp.float32).reshape(G, HD)
    tbar2 = 2.0 * jnp.sum(w_norm[:, None] * tgt, axis=0, keepdims=True)  # (1, HD)
    c = jnp.sum(w_norm * jnp.sum(tgt * tgt, axis=1))               # scalar
    inv_hd = jnp.float32(1.0 / HD)
    scalars = jnp.stack([-c * inv_hd, -inv_hd]).astype(jnp.float32)  # (2,) f32

    # ---- lane-dense layout: flatten (H, D) -> HD (free reshape, no pad) ----
    x2 = x.reshape(B, HD)                 # keep native dtype; cast in-kernel

    # ---- batch tiling: pad B to a multiple of 8 at most (cheap / usually a
    #      no-op), then pick a divisor tile under a VMEM budget so the
    #      double-buffered tiles also fit v7x's smaller (64 MiB) VMEM ----
    Bp = ((B + 7) // 8) * 8
    if Bp != B:
        x2 = jnp.pad(x2, ((0, Bp - B), (0, 0)))
    bt = _pick_b_tile(Bp, HD, jnp.dtype(x.dtype).itemsize, requested=b_tile)
    grid = (Bp // bt,)

    out = pl.pallas_call(
        _value_guide_kernel,
        out_shape=jax.ShapeDtypeStruct((Bp, 1), jnp.float32),
        grid=grid,
        in_specs=[
            # x: streamed per batch tile (auto double-buffered DMA pipeline);
            # lane block == full HD so no lane padding is required.
            pl.BlockSpec((bt, HD), lambda i: (i, 0)),
            # 2*t̄: constant index map -> kept resident, DMA'd once
            pl.BlockSpec((1, HD), lambda i: (0, 0)),
            # [-c/HD, -1/HD] scalars in SMEM
            pl.BlockSpec(memory_space=pltpu.MemorySpace.SMEM),
        ],
        out_specs=pl.BlockSpec((bt, 1), lambda i: (i, 0)),
        compiler_params=pltpu.CompilerParams(
            dimension_semantics=("parallel",),  # batch grid shards across TCs (v7x)
        ),
    )(x2, tbar2, scalars)

    return out[:B, 0]                      # .squeeze(dim=-1)


def _reference_forward(x, targets, weights):
    """Pure-JAX reference mirroring the un-collapsed module semantics."""
    xf = x.astype(jnp.float32)
    w = weights.astype(jnp.float32)
    w_sum = jnp.sum(w)
    out = jnp.zeros((x.shape[0],), jnp.float32)
    for g in range(targets.shape[0]):
        diff = xf - targets[g].astype(jnp.float32)[None]
        out = out + (w[g] / w_sum) * (-jnp.mean(diff * diff, axis=(1, 2)))
    return out


if __name__ == "__main__":
    key = jax.random.PRNGKey(0)
    k_x, k_t = jax.random.split(key)

    B, H, D = 16, 8, 32      # batch, horizon, transition_dim  (H*D = 256 lanes)
    G = 3                    # quadratic terms in the synthetic value model

    x = jax.random.normal(k_x, (B, H, D), dtype=jnp.float32)
    targets = jax.random.normal(k_t, (G, H, D), dtype=jnp.float32)
    weights = jnp.array([1.0, 2.0, 3.0], dtype=jnp.float32)

    cond, t = None, jnp.zeros((B,), jnp.int32)   # unused by the quadratic model

    # b_tile=8 so the small demo still exercises a 2-step pipelined batch grid
    y = value_guide_forward(x, cond, t, targets, weights, b_tile=8)
    y = jax.block_until_ready(y)

    y_ref = _reference_forward(x, targets, weights)
    np.testing.assert_allclose(np.asarray(y), np.asarray(y_ref),
                               rtol=1e-5, atol=1e-5)
    print("KERNEL_OK")
</pallas_src>

<mosaic_0001>
module attributes {stable_mosaic.version = 11 : i64} {
  func.func @_value_guide_kernel(%arg0: i32, %arg1: memref<8x256xf32, #tpu.memory_space<vmem>>, %arg2: memref<1x256xf32, #tpu.memory_space<vmem>>, %arg3: memref<2xf32, #tpu.memory_space<smem>>, %arg4: memref<8x1xf32, #tpu.memory_space<vmem>>) attributes {dimension_semantics = [#tpu.dimension_semantics<parallel>], iteration_bounds = array<i64: 2>, scalar_prefetch = 0 : i64, scratch_operands = 0 : i64, tpu.core_type = #tpu.core_type<tc>, window_params = [{transform_indices = @transform_0, window_bounds = array<i64: 8, 256>}, {pipeline_mode = #tpu.pipeline_mode<synchronous>, transform_indices = @transform_1, window_bounds = array<i64: 1, 256>}, {transform_indices = @transform_2, window_bounds = array<i64: 2>}, {transform_indices = @transform_3, window_bounds = array<i64: 8, 1>}]} {
    %c0 = arith.constant 0 : index
    %c0_0 = arith.constant 0 : index
    %0 = vector.load %arg1[%c0, %c0_0] : memref<8x256xf32, #tpu.memory_space<vmem>>, vector<8x256xf32>
    %c0_1 = arith.constant 0 : index
    %c0_2 = arith.constant 0 : index
    %1 = vector.load %arg2[%c0_1, %c0_2] : memref<1x256xf32, #tpu.memory_space<vmem>>, vector<1x256xf32>
    %2 = vector.broadcast %1 : vector<1x256xf32> to vector<8x256xf32>
    %3 = arith.subf %0, %2 : vector<8x256xf32>
    %4 = arith.mulf %0, %3 : vector<8x256xf32>
    %cst = arith.constant dense<0.000000e+00> : vector<8xf32>
    %5 = vector.multi_reduction <add>, %4, %cst [1] : vector<8x256xf32> to vector<8xf32>
    %6 = vector.shape_cast %5 : vector<8xf32> to vector<8x1xf32>
    %c1 = arith.constant 1 : index
    %7 = memref.load %arg3[%c1] : memref<2xf32, #tpu.memory_space<smem>>
    %8 = vector.broadcast %7 : f32 to vector<8x1xf32>
    %9 = arith.mulf %6, %8 : vector<8x1xf32>
    %c0_3 = arith.constant 0 : index
    %10 = memref.load %arg3[%c0_3] : memref<2xf32, #tpu.memory_space<smem>>
    %11 = vector.broadcast %10 : f32 to vector<8x1xf32>
    %12 = arith.addf %9, %11 : vector<8x1xf32>
    %c0_4 = arith.constant 0 : index
    %c0_5 = arith.constant 0 : index
    %13 = vector.load %arg4[%c0_4, %c0_5] : memref<8x1xf32, #tpu.memory_space<vmem>>, vector<8x1xf32>
    tpu.vector_store %arg4[%c0_4, %c0_5], %12 {strides = array<i32>} : memref<8x1xf32, #tpu.memory_space<vmem>>, vector<8x1xf32>,
    return
  }
  func.func @transform_0(%arg0: i32) -> (i32, i32) {
    %c0_i32 = arith.constant 0 : i32
    %c0_i32_0 = arith.constant 0 : i32
    return %arg0, %c0_i32 : i32, i32
  }
  func.func @transform_1(%arg0: i32) -> (i32, i32) {
    %c0_i32 = arith.constant 0 : i32
    %c0_i32_0 = arith.constant 0 : i32
    %c0_i32_1 = arith.constant 0 : i32
    return %c0_i32, %c0_i32_0 : i32, i32
  }
  func.func @transform_2(%arg0: i32) -> i32 {
    %c0_i32 = arith.constant 0 : i32
    %c0_i32_0 = arith.constant 0 : i32
    return %c0_i32 : i32
  }
  func.func @transform_3(%arg0: i32) -> (i32, i32) {
    %c0_i32 = arith.constant 0 : i32
    %c0_i32_0 = arith.constant 0 : i32
    return %arg0, %c0_i32 : i32, i32
  }
}

</mosaic_0001>

<llo_original>
// kernel: tpu_custom_call.1
$region0: #{tpu_custom_call.1}
  #allocation0 [shape = 'u32[]', space=smem, size = 0x4, offset = 0x4, fixed_abs, tag = 'smem constant byte address 0x4 - core index']
  #allocation1 [shape = 'u32[144,128]{1,0:T(1,128)}', space=vmem, size = 0x12000, scoped, tag = 'internal scratch']
  %s0 = inlined_call_operand.hbm [shape: f32[16,256], index: 0, kind: input, shape index: {}]
  %s1 = inlined_call_operand.vmem [shape: f32[1,256], index: 1, kind: input, shape index: {}]
  %s2 = inlined_call_operand.vmem [shape: f32[2], index: 2, kind: input, shape index: {}]
  %s3 = inlined_call_operand.vmem [shape: f32[16,1], index: 3, kind: output, shape index: {}]
  %s4 = sld [smem:[#allocation0]]
  $region53: #{tpu_custom_call.1} parent=0
    _
  %s6 = ssub.s32 1, %s4
  %s7 = scalar_select 0, %s6, %s4
  $region1: #{tpu_custom_call.1} parent=0
    #allocation2 [shape = 'u8[16384]{0}', space=vmem, size = 0x4000, scoped, tag = 'input window, operand 0']
    #allocation3 [shape = 's32[2]{0}', space=sflag, size = 0x8, scoped, tag = 'scoped memory for tpu_custom_call.1']
    #allocation4 [shape = 's32[2]{0}', space=sflag, size = 0x8, scoped, tag = 'scoped memory for tpu_custom_call.1']
    #allocation5 [shape = 'u8[512]{0}', space=smem, size = 0x200, scoped, tag = 'input window, operand 2, single buffered']
    %8 = vsyncpa [#allocation3], 0
    %s9 = scalar_lea.sflag [#allocation3], 1
    %10 = vsyncpa %s9, 0
    %11 = vsyncpa [#allocation4], 0
    loop: start=0, step=1, limit=4
    $region2: #{tpu_custom_call.1} parent=1 // loop_pre_header
      _
    $region3: #{tpu_custom_call.1} parent=1 // loop_header
      %s13 = sphi 0, %s17
      %p14 = scmp.ge.s32.totalorder %s13, 4
      %s23 = sphi 0, %s25
      %s26 = sphi 0, %s23
      %s27 = sphi 0, %s26
      %s43 = sphi 0, %s27
      %s47 = sphi 0, %s47
      %s49 = sphi 0, %s47
      %s50 = sphi 0, %s49
      %s64 = sphi 0, %s50
      %s68 = sphi 0, %s68
      %s70 = sphi 0, %s68
      %s71 = sphi 0, %s70
      %s85 = sphi 0, %s71
      %s91 = sphi 0, %s93
      %s94 = sphi 0, %s91
      %s95 = sphi 0, %s94
      %s111 = sphi 0, %s95
    $region4: #{tpu_custom_call.1} parent=1 // loop_header_branch
      %16 = sbr.rel (%p14) target = $region8
    $region5: #{tpu_custom_call.1} parent=1 // loop_body
      %s18 = ssub.s32 %s13, 1
      %s19 = ssub.s32 %s13, 2
      %s20 = sadd.s32 %s13, 1
      %s21 = ssub.s32 %s13, %s20
      %p22 = scmp.eq.s32.totalorder %s21, 0
      %s24 = sadd.s32 %s23, 1
      %s25 = scalar_select %p22, %s23, %s24
      %p28 = pneg %p22
      %p29 = scmp.eq.s32.totalorder %s13, 1
      %p30 = por %p28, %p29
      %p31 = scmp.ne.s32.totalorder %s23, %s26
      %p32 = scmp.eq.s32.totalorder %s13, 0
      %p33 = por %p31, %p32
      %p34 = scmp.ne.s32.totalorder %s23, %s26
      %p35 = scmp.eq.s32.totalorder %s18, 1
      %p36 = por %p34, %p35
      %p37 = scmp.ne.s32.totalorder %s26, %s27
      %p38 = scmp.eq.s32.totalorder %s18, 0
      %p39 = por %p37, %p38
      %p40 = scmp.ne.s32.totalorder %s26, %s27
      %p41 = scmp.eq.s32.totalorder %s19, 1
      %p42 = por %p40, %p41
      %p44 = scmp.ne.s32.totalorder %s27, %s43
      %p45 = scmp.eq.s32.totalorder %s19, 0
      %p46 = por %p44, %p45
      %s48 = sadd.s32 %s47, 1
      %p51 = scmp.eq.s32.totalorder %s13, 1
      %p52 = scmp.ne.s32.totalorder %s47, %s49
      %p53 = scmp.eq.s32.totalorder %s13, 0
      %p54 = por %p52, %p53
      %p55 = scmp.ne.s32.totalorder %s47, %s49
      %p56 = scmp.eq.s32.totalorder %s18, 1
      %p57 = por %p55, %p56
      %p58 = scmp.ne.s32.totalorder %s49, %s50
      %p59 = scmp.eq.s32.totalorder %s18, 0
      %p60 = por %p58, %p59
      %p61 = scmp.ne.s32.totalorder %s49, %s50
      %p62 = scmp.eq.s32.totalorder %s19, 1
      %p63 = por %p61, %p62
      %p65 = scmp.ne.s32.totalorder %s50, %s64
      %p66 = scmp.eq.s32.totalorder %s19, 0
      %p67 = por %p65, %p66
      %s69 = sadd.s32 %s68, 1
      %p72 = scmp.eq.s32.totalorder %s13, 1
      %p73 = scmp.ne.s32.totalorder %s68, %s70
      %p74 = scmp.eq.s32.totalorder %s13, 0
      %p75 = por %p73, %p74
      %p76 = scmp.ne.s32.totalorder %s68, %s70
      %p77 = scmp.eq.s32.totalorder %s18, 1
      %p78 = por %p76, %p77
      %p79 = scmp.ne.s32.totalorder %s70, %s71
      %p80 = scmp.eq.s32.totalorder %s18, 0
      %p81 = por %p79, %p80
      %p82 = scmp.ne.s32.totalorder %s70, %s71
      %p83 = scmp.eq.s32.totalorder %s19, 1
      %p84 = por %p82, %p83
      %p86 = scmp.ne.s32.totalorder %s71, %s85
      %p87 = scmp.eq.s32.totalorder %s19, 0
      %p88 = por %p86, %p87
      %s89 = ssub.s32 %s13, %s20
      %p90 = scmp.eq.s32.totalorder %s89, 0
      %s92 = sadd.s32 %s91, 1
      %s93 = scalar_select %p90, %s91, %s92
      %p96 = pneg %p90
      %p97 = scmp.eq.s32.totalorder %s13, 1
      %p98 = por %p96, %p97
      %p99 = scmp.ne.s32.totalorder %s91, %s94
      %p100 = scmp.eq.s32.totalorder %s13, 0
      %p101 = por %p99, %p100
      %p102 = scmp.ne.s32.totalorder %s91, %s94
      %p103 = scmp.eq.s32.totalorder %s18, 1
      %p104 = por %p102, %p103
      %p105 = scmp.ne.s32.totalorder %s94, %s95
      %p106 = scmp.eq.s32.totalorder %s18, 0
      %p107 = por %p105, %p106
      %p108 = scmp.ne.s32.totalorder %s94, %s95
      %p109 = scmp.eq.s32.totalorder %s19, 1
      %p110 = por %p108, %p109
      %p112 = scmp.ne.s32.totalorder %s95, %s111
      %p113 = scmp.eq.s32.totalorder %s19, 0
      %p114 = por %p112, %p113
      %p115 = scmp.le.s32.totalorder 1, %s13
      %p116 = scmp.lt.s32.totalorder %s13, 3
      %p117 = pnand %p115, %p116
      %p118 = pneg %p117
      // Predicated region
      $region9: #{tpu_custom_call.1} parent=5 // pred_check
        _
      $region10: #{tpu_custom_call.1} parent=5 // pred_check_branch
        %120 = sbr.rel (%p117) target = $region12
      $region11: #{tpu_custom_call.1} parent=5 // pred_region
        %s121 = ssub.s32 %s13, 1
        // Predicated region
        $region13: #{tpu_custom_call.1} parent=11 // pred_check
          %p122 = pneg %p60
        $region14: #{tpu_custom_call.1} parent=11 // pred_check_branch
          %124 = sbr.rel (%p122) target = $region16
        $region15: #{tpu_custom_call.1} parent=11 // pred_region
          _
        $region16: #{tpu_custom_call.1} parent=11 // pred_fallthru
          _
        // Predicated region
        $region17: #{tpu_custom_call.1} parent=11 // pred_check
          %p125 = pneg %p81
        $region18: #{tpu_custom_call.1} parent=11 // pred_check_branch
          %127 = sbr.rel (%p125) target = $region20
        $region19: #{tpu_custom_call.1} parent=11 // pred_region
          %s129 = ssub.s32 16, 16
          %130 = vsyncadd [#allocation4], %s129
          %s132 = sshll.u32 %s2, 4
          %s133 = int_to_ptr.vmem [resolvable:$true] %s132
          %135 = dma.vmem_to_smem %s133, 16, [#allocation5], [#allocation4]
        $region20: #{tpu_custom_call.1} parent=11 // pred_fallthru
          _
      $region12: #{tpu_custom_call.1} parent=5 // pred_fallthru
        _
      %p136 = scmp.lt.s32.totalorder %s13, 2
      // Predicated region
      $region21: #{tpu_custom_call.1} parent=5 // pred_check
        %p137 = pneg %p136
      $region22: #{tpu_custom_call.1} parent=5 // pred_check_branch
        %139 = sbr.rel (%p137) target = $region24
      $region23: #{tpu_custom_call.1} parent=5 // pred_region
        // Predicated region
        $region25: #{tpu_custom_call.1} parent=23 // pred_check
          %p140 = pneg %p33
        $region26: #{tpu_custom_call.1} parent=23 // pred_check_branch
          %142 = sbr.rel (%p140) target = $region28
        $region27: #{tpu_custom_call.1} parent=23 // pred_region
          %s143 = sand.u32 %s23, 1
          %s144 = scalar_lea.sflag [#allocation3], %s143
          %s145 = sand.u32 %s23, 1
          %s146 = smul.addr %s145, 16
          %s147 = scalar_lea.vmem [#allocation2], %s146
          %s149 = ssub.s32 256, 256
          %150 = vsyncadd %s144, %s149
          %s151 = smul.addr %s13, 2
          %s152 = smul.addr %s151, 128
          %s153 = scalar_lea.hbm %s0, %s152
          %s155 = sshll.u32 %s147, 4
          %s156 = int_to_ptr.vmem [resolvable:$true] %s155
          %158 = dma.hbm_to_vmem [thread:$0]  %s153, 256, %s156, %s144
        $region28: #{tpu_custom_call.1} parent=23 // pred_fallthru
          _
      $region24: #{tpu_custom_call.1} parent=5 // pred_fallthru
        _
      %p159 = scmp.le.s32.totalorder 1, %s13
      %p160 = scmp.lt.s32.totalorder %s13, 3
      %p161 = pnand %p159, %p160
      %p162 = pneg %p161
      // Predicated region
      $region29: #{tpu_custom_call.1} parent=5 // pred_check
        _
      $region30: #{tpu_custom_call.1} parent=5 // pred_check_branch
        %164 = sbr.rel (%p161) target = $region32
      $region31: #{tpu_custom_call.1} parent=5 // pred_region
        %s165 = ssub.s32 %s13, 1
        %s166 = sand.u32 %s26, 1
        %s167 = scalar_lea.sflag [#allocation3], %s166
        %s168 = sand.u32 %s26, 1
        %s169 = smul.addr %s168, 16
        %s170 = scalar_lea.vmem [#allocation2], %s169
        // Predicated region
        $region33: #{tpu_custom_call.1} parent=31 // pred_check
          %p171 = pneg %p39
        $region34: #{tpu_custom_call.1} parent=31 // pred_check_branch
          %173 = sbr.rel (%p171) target = $region36
        $region35: #{tpu_custom_call.1} parent=31 // pred_region
          %174 = dma.done %s167, 256
        $region36: #{tpu_custom_call.1} parent=31 // pred_fallthru
          _
        // Predicated region
        $region37: #{tpu_custom_call.1} parent=31 // pred_check
          %p175 = pneg %p81
        $region38: #{tpu_custom_call.1} parent=31 // pred_check_branch
          %177 = sbr.rel (%p175) target = $region40
        $region39: #{tpu_custom_call.1} parent=31 // pred_region
          %178 = dma.done [#allocation4], 16
        $region40: #{tpu_custom_call.1} parent=31 // pred_fallthru
          _
        %179 = sfence
        %s180 = sand.u32 %s26, 1
        %s181 = scalar_lea.sflag [#allocation3], %s180
        %s182 = sand.u32 %s26, 1
        %s183 = smul.addr %s182, 16
        %s184 = scalar_lea.vmem [#allocation2], %s183
        %p185 = pneg %p39
        %p186 = pneg %p36
        %p187 = pneg %p60
        %p188 = pneg %p57
        %p189 = pneg %p81
        %p190 = pneg %p78
        %p191 = pneg %p107
        %p192 = pneg %p104
        %p193 = scmp.lt.s32.totalorder %s18, 1
        %s194 = scalar_select %p193, %s18, 1
        %s195 = smul.addr %s194, 8
        %s196 = scalar_lea.vmem %s3, %s195
        %p197 = scmp.lt.s32.totalorder %s18, 1
        %s198 = scalar_select %p197, %s18, 1
        %s199 = smul.addr %s198, 8
        %s200 = scalar_lea.vmem %s3, %s199
        %v201 = vld [vmem:[%s170] sm:$0xff]
        %v202 = vld [vmem:[%s170 + $0x8] sm:$0xff]
        %v203 = vld [vmem:[%s1] sm:$0x3]
        %v205 = vlaneseq
        %v206 = vshrl.u32 %v205, 7
        %v207 = vsub.s32 0, %v206
        %v208 = vrot.slane %v203, %v207
        %v209 = vlaneseq
        %v210 = vshrl.u32 %v209, 7
        %v211 = vsub.s32 1, %v210
        %v212 = vrot.slane %v203, %v211
        %v215 = vsub.f32 %v201, %v208
        %v216 = vsub.f32 %v202, %v212
        %v217 = vmul.f32 %v201, %v215
        %v218 = vmul.f32 %v202, %v216
        %v219 = vadd.f32 %v217, %v218
        %220 = vadd.xlane.f32.xlu0 %v219
        %v221 = vpop.xlane.xlu0 %220
        %s222 = sld [smem:[#allocation5 + $0x1]]
        %v223 = vstv %s222
        %v224 = vmul.f32 %v221, %v223
        %s225 = sld [smem:[#allocation5]]
        %v226 = vstv %s225
        %v227 = vadd.f32 %v224, %v226
        %vm228 = vcmask 7168
        %229 = vst.msk [vmem:[%s200] sm:$0xff] %vm228, %v227
        %p230 = scmp.lt.s32.totalorder %s18, 1
        %s231 = scalar_select %p230, %s18, 1
        %s232 = smul.addr %s231, 8
        %s233 = scalar_lea.vmem %s3, %s232
        // Predicated region
        $region41: #{tpu_custom_call.1} parent=31 // pred_check
          %p234 = pneg %p104
        $region42: #{tpu_custom_call.1} parent=31 // pred_check_branch
          %236 = sbr.rel (%p234) target = $region44
        $region43: #{tpu_custom_call.1} parent=31 // pred_region
          _
        $region44: #{tpu_custom_call.1} parent=31 // pred_fallthru
          _
      $region32: #{tpu_custom_call.1} parent=5 // pred_fallthru
        _
      %p237 = scmp.le.s32.totalorder 2, %s13
      // Predicated region
      $region45: #{tpu_custom_call.1} parent=5 // pred_check
        %p238 = pneg %p237
      $region46: #{tpu_custom_call.1} parent=5 // pred_check_branch
        %240 = sbr.rel (%p238) target = $region48
      $region47: #{tpu_custom_call.1} parent=5 // pred_region
        %s241 = ssub.s32 %s13, 2
        // Predicated region
        $region49: #{tpu_custom_call.1} parent=47 // pred_check
          %p242 = pneg %p110
        $region50: #{tpu_custom_call.1} parent=47 // pred_check_branch
          %244 = sbr.rel (%p242) target = $region52
        $region51: #{tpu_custom_call.1} parent=47 // pred_region
          %p245 = scmp.lt.s32.totalorder %s19, 1
          %s246 = scalar_select %p245, %s19, 1
          %s247 = smul.addr %s246, 8
          %s248 = scalar_lea.vmem %s3, %s247
        $region52: #{tpu_custom_call.1} parent=47 // pred_fallthru
          _
      $region48: #{tpu_custom_call.1} parent=5 // pred_fallthru
        _
    $region6: #{tpu_custom_call.1} parent=1 // loop_footer
      %s17 = sadd.s32 1, %s13
    $region7: #{tpu_custom_call.1} parent=1 // loop_footer_branch
      %12 = sbr.rel target = $region3
    $region8: #{tpu_custom_call.1} parent=1 // loop_exit
      _
    %249 = vsyncpa [#allocation3], 1
    %s250 = scalar_lea.sflag [#allocation3], 1
    %251 = vsyncpa %s250, 1
    %252 = vsyncpa [#allocation4], 1
    %s253 = scalar_lea.sflag [#allocation4], 1
    %254 = vsyncpa %s253, 1

</llo_original>
